<compile_context>
chip_gen: v7x
topology: tpu7x:2x2x1
jax: 0.10.0
libtpu: 0.0.40
codegen_flags: <defaults>
</compile_context>

<pallas_src>
import functools

import jax
import jax.numpy as jnp
import numpy as np
from jax.experimental import pallas as pl
from jax.experimental.pallas import tpu as pltpu

IN_F = 10    # block1 in_features
OUT_F = 20   # final out_features
MAX_TILE_B = 8192  # sweet spot for mem-bound tiles; keeps VMEM < 32 MiB scoped


def _round_up(n, m):
    return (n + m - 1) // m * m


def _affine_kernel(x_ref, w_ref, b_ref, o_ref):
    # y = x @ W_eff + b_eff : one MXU push per batch tile, one VPU bias add,
    # dense (tb, 20) store (masked on the trailing partial block).
    o_ref[...] = (
        jnp.dot(x_ref[...], w_ref[...], preferred_element_type=jnp.float32)
        + b_ref[...]
    ).astype(o_ref.dtype)


def fold_params(params):
    """Fold the three chained Linears into one affine transform. Call once."""
    w1, b1 = params["w1"], params["b1"]
    w2, b2 = params["w2"], params["b2"]
    w3, b3 = params["w3"], params["b3"]
    w_eff = w1 @ w2 @ w3                  # (10, 20)
    b_eff = (b1 @ w2 + b2) @ w3 + b3      # (1, 20)
    return {"w_eff": w_eff, "b_eff": b_eff}


def _pick_tile(batch):
    # Sublane-aligned tile; aim for >= 2 grid steps (megacore on v7x) while
    # capping at MAX_TILE_B so double-buffered VMEM stays under the scoped limit.
    half = -(-batch // 2)                  # cdiv(B, 2)
    tb = min(MAX_TILE_B, _round_up(max(half, 8), 8))
    return tb


@jax.jit
def data_parallel_model(x, folded):
    """x: (B, 10) float32. folded: {'w_eff': (10,20), 'b_eff': (1,20)}."""
    w_eff, b_eff = folded["w_eff"], folded["b_eff"]
    B = x.shape[0]
    tb = _pick_tile(B)
    grid = (pl.cdiv(B, tb),)

    cost = pl.CostEstimate(
        flops=2 * B * IN_F * OUT_F + B * OUT_F,
        transcendentals=0,
        bytes_accessed=4 * (B * IN_F + IN_F * OUT_F + OUT_F + B * OUT_F),
    )

    return pl.pallas_call(
        _affine_kernel,
        out_shape=jax.ShapeDtypeStruct((B, OUT_F), jnp.float32),
        grid=grid,
        in_specs=[
            pl.BlockSpec((tb, IN_F), lambda i: (i, 0)),     # batch-tiled, pipelined
            pl.BlockSpec((IN_F, OUT_F), lambda i: (0, 0)),  # folded weight, resident
            pl.BlockSpec((1, OUT_F), lambda i: (0, 0)),     # folded bias, resident
        ],
        out_specs=pl.BlockSpec((tb, OUT_F), lambda i: (i, 0)),
        compiler_params=pltpu.CompilerParams(
            dimension_semantics=("parallel",),  # megacore sharding on v7x
        ),
        cost_estimate=cost,
    )(x, w_eff, b_eff)


def init_params(key):
    """Deterministic init mimicking nn.Linear's U(-1/sqrt(fan_in), 1/sqrt(fan_in))."""
    keys = jax.random.split(key, 6)

    def linear(kw, kb, fan_in, fan_out):
        bound = 1.0 / np.sqrt(fan_in)
        # Stored as (in, out) == W^T relative to PyTorch's (out, in).
        w = jax.random.uniform(kw, (fan_in, fan_out), jnp.float32, -bound, bound)
        b = jax.random.uniform(kb, (1, fan_out), jnp.float32, -bound, bound)
        return w, b

    w1, b1 = linear(keys[0], keys[1], 10, 20)
    w2, b2 = linear(keys[2], keys[3], 20, 20)
    w3, b3 = linear(keys[4], keys[5], 20, 20)
    return {"w1": w1, "b1": b1, "w2": w2, "b2": b2, "w3": w3, "b3": b3}


def reference(x, p):
    h = x @ p["w1"] + p["b1"]
    h = h @ p["w2"] + p["b2"]
    return h @ p["w3"] + p["b3"]


if __name__ == "__main__":
    key = jax.random.PRNGKey(0)
    pkey, xkey, xkey2 = jax.random.split(key, 3)
    params = init_params(pkey)
    folded = jax.tree_util.tree_map(jax.block_until_ready, fold_params(params))

    # Small shape consistent with the module: batch=8, in_features=10.
    x = jax.random.normal(xkey, (8, 10), jnp.float32)
    out = jax.block_until_ready(data_parallel_model(x, folded))
    # rtol=1e-5: folding changes f32 summation order vs the 3-layer reference;
    # at these magnitudes (|y| ~ O(1)) the deviation is well inside 1e-5.
    np.testing.assert_allclose(
        np.asarray(out), np.asarray(reference(x, params)), rtol=1e-5, atol=1e-5
    )
    assert out.shape == (8, 20) and out.dtype == jnp.float32

    # Exercise the 2-step grid + masked partial trailing block (1000 = 504 + 496).
    x2 = jax.random.normal(xkey2, (1000, 10), jnp.float32)
    out2 = jax.block_until_ready(data_parallel_model(x2, folded))
    np.testing.assert_allclose(
        np.asarray(out2), np.asarray(reference(x2, params)), rtol=1e-5, atol=1e-5
    )
    assert out2.shape == (1000, 20)

    print("KERNEL_OK")
</pallas_src>

<mosaic_0001>
module attributes {stable_mosaic.version = 11 : i64} {
  func.func @_affine_kernel(%arg0: i32, %arg1: memref<8x10xf32, #tpu.memory_space<vmem>>, %arg2: memref<10x20xf32, #tpu.memory_space<vmem>>, %arg3: memref<1x20xf32, #tpu.memory_space<vmem>>, %arg4: memref<8x20xf32, #tpu.memory_space<vmem>>) attributes {dimension_semantics = [#tpu.dimension_semantics<parallel>], iteration_bounds = array<i64: 1>, scalar_prefetch = 0 : i64, scratch_operands = 0 : i64, tpu.core_type = #tpu.core_type<tc>, window_params = [{transform_indices = @transform_0, window_bounds = array<i64: 8, 10>}, {pipeline_mode = #tpu.pipeline_mode<synchronous>, transform_indices = @transform_1, window_bounds = array<i64: 10, 20>}, {pipeline_mode = #tpu.pipeline_mode<synchronous>, transform_indices = @transform_2, window_bounds = array<i64: 1, 20>}, {transform_indices = @transform_3, window_bounds = array<i64: 8, 20>}]} {
    %c0 = arith.constant 0 : index
    %c0_0 = arith.constant 0 : index
    %0 = vector.load %arg1[%c0, %c0_0] : memref<8x10xf32, #tpu.memory_space<vmem>>, vector<8x10xf32>
    %c0_1 = arith.constant 0 : index
    %c0_2 = arith.constant 0 : index
    %1 = vector.load %arg2[%c0_1, %c0_2] : memref<10x20xf32, #tpu.memory_space<vmem>>, vector<10x20xf32>
    %cst = arith.constant dense<0.000000e+00> : vector<8x20xf32>
    %2 = tpu.matmul %0, %1, %cst {dimension_numbers = #tpu.dot_dimension_numbers<[1], [0], [0], [1], [0, 0, 1, 1], [], []>} : vector<8x10xf32>, vector<10x20xf32>, vector<8x20xf32> -> vector<8x20xf32>
    %c0_3 = arith.constant 0 : index
    %c0_4 = arith.constant 0 : index
    %3 = vector.load %arg3[%c0_3, %c0_4] : memref<1x20xf32, #tpu.memory_space<vmem>>, vector<1x20xf32>
    %4 = vector.broadcast %3 : vector<1x20xf32> to vector<8x20xf32>
    %5 = arith.addf %2, %4 : vector<8x20xf32>
    %c0_5 = arith.constant 0 : index
    %c0_6 = arith.constant 0 : index
    %6 = vector.load %arg4[%c0_5, %c0_6] : memref<8x20xf32, #tpu.memory_space<vmem>>, vector<8x20xf32>
    tpu.vector_store %arg4[%c0_5, %c0_6], %5 {strides = array<i32>} : memref<8x20xf32, #tpu.memory_space<vmem>>, vector<8x20xf32>,
    return
  }
  func.func @transform_0(%arg0: i32) -> (i32, i32) {
    %c0_i32 = arith.constant 0 : i32
    %c0_i32_0 = arith.constant 0 : i32
    return %arg0, %c0_i32 : i32, i32
  }
  func.func @transform_1(%arg0: i32) -> (i32, i32) {
    %c0_i32 = arith.constant 0 : i32
    %c0_i32_0 = arith.constant 0 : i32
    %c0_i32_1 = arith.constant 0 : i32
    return %c0_i32, %c0_i32_0 : i32, i32
  }
  func.func @transform_2(%arg0: i32) -> (i32, i32) {
    %c0_i32 = arith.constant 0 : i32
    %c0_i32_0 = arith.constant 0 : i32
    %c0_i32_1 = arith.constant 0 : i32
    return %c0_i32, %c0_i32_0 : i32, i32
  }
  func.func @transform_3(%arg0: i32) -> (i32, i32) {
    %c0_i32 = arith.constant 0 : i32
    %c0_i32_0 = arith.constant 0 : i32
    return %arg0, %c0_i32 : i32, i32
  }
}

</mosaic_0001>

<llo_original>
// kernel: data_parallel_model.1
$region0: #{data_parallel_model.1}
  #allocation0 [shape = 'u32[]', space=smem, size = 0x4, offset = 0x4, fixed_abs, tag = 'smem constant byte address 0x4 - core index']
  #allocation1 [shape = 'u32[144,128]{1,0:T(1,128)}', space=vmem, size = 0x12000, scoped, tag = 'internal scratch']
  %s0 = inlined_call_operand.hbm [shape: f32[8,10], index: 0, kind: input, shape index: {}]
  %s1 = inlined_call_operand.hbm [shape: f32[10,20], index: 1, kind: input, shape index: {}]
  %s2 = inlined_call_operand.vmem [shape: f32[1,20], index: 2, kind: input, shape index: {}]
  %s3 = inlined_call_operand.hbm [shape: f32[8,20], index: 3, kind: output, shape index: {}]
  %s4 = sld [smem:[#allocation0]]
  $region30: #{data_parallel_model.1} parent=0
    _
  %s6 = ssub.s32 1, %s4
  %s7 = scalar_select 0, %s6, %s4
  $region1: #{data_parallel_model.1} parent=0
    #allocation2 [shape = 'u8[4096]{0}', space=vmem, size = 0x1000, scoped, tag = 'input window, operand 0, single buffered']
    #allocation3 [shape = 's32[1]{0}', space=sflag, size = 0x4, scoped, tag = 'scoped memory for data_parallel_model.1']
    #allocation4 [shape = 's32[1]{0}', space=sflag, size = 0x4, scoped, tag = 'scoped memory for data_parallel_model.1']
    #allocation5 [shape = 'u8[8192]{0}', space=vmem, size = 0x2000, scoped, tag = 'input window, operand 1, single buffered']
    #allocation6 [shape = 's32[1]{0}', space=sflag, size = 0x4, scoped, tag = 'scoped memory for data_parallel_model.1']
    #allocation7 [shape = 'u8[4096]{0}', space=vmem, size = 0x1000, scoped, tag = 'output window, operand 0, single buffered']
    %8 = vsyncpa [#allocation3], 0
    %9 = vsyncpa [#allocation6], 0
    %10 = vsyncpa [#allocation4], 0
    // Predicated region
    $region2: #{data_parallel_model.1} parent=1 // pred_check
      _
    $region3: #{data_parallel_model.1} parent=1 // pred_check_branch
      %12 = sbr.rel (0) target = $region5
    $region4: #{data_parallel_model.1} parent=1 // pred_region
      %s14 = ssub.s32 128, 128
      %15 = vsyncadd [#allocation3], %s14
      %s17 = sshll.u32 [#allocation2], 4
      %s18 = int_to_ptr.vmem [resolvable:$true] %s17
      %20 = dma.hbm_to_vmem [thread:$0]  %s0, 128, %s18, [#allocation3]
    $region5: #{data_parallel_model.1} parent=1 // pred_fallthru
      _
    // Predicated region
    $region6: #{data_parallel_model.1} parent=1 // pred_check
      _
    $region7: #{data_parallel_model.1} parent=1 // pred_check_branch
      %22 = sbr.rel (0) target = $region9
    $region8: #{data_parallel_model.1} parent=1 // pred_region
      %s24 = ssub.s32 256, 256
      %25 = vsyncadd [#allocation6], %s24
      %s26 = sshll.u32 [#allocation5], 4
      %s27 = int_to_ptr.vmem [resolvable:$true] %s26
      %32 = dma.hbm_to_vmem [thread:$0]  %s1, 256, %s27, [#allocation6], 128, 128, 8
    $region9: #{data_parallel_model.1} parent=1 // pred_fallthru
      _
    // Predicated region
    $region10: #{data_parallel_model.1} parent=1 // pred_check
      _
    $region11: #{data_parallel_model.1} parent=1 // pred_check_branch
      %34 = sbr.rel (0) target = $region13
    $region12: #{data_parallel_model.1} parent=1 // pred_region
      _
    $region13: #{data_parallel_model.1} parent=1 // pred_fallthru
      _
    // Predicated region
    $region14: #{data_parallel_model.1} parent=1 // pred_check
      _
    $region15: #{data_parallel_model.1} parent=1 // pred_check_branch
      %36 = sbr.rel (0) target = $region17
    $region16: #{data_parallel_model.1} parent=1 // pred_region
      %37 = dma.done [#allocation3], 128
    $region17: #{data_parallel_model.1} parent=1 // pred_fallthru
      _
    // Predicated region
    $region18: #{data_parallel_model.1} parent=1 // pred_check
      _
    $region19: #{data_parallel_model.1} parent=1 // pred_check_branch
      %39 = sbr.rel (0) target = $region21
    $region20: #{data_parallel_model.1} parent=1 // pred_region
      %40 = dma.done [#allocation6], 256
    $region21: #{data_parallel_model.1} parent=1 // pred_fallthru
      _
    %v41 = vld [vmem:[#allocation2] sm:$0xff]
    %v42 = vld [vmem:[#allocation5] sm:$0xff]
    %v43 = vld [vmem:[#allocation5 + $0x8] sm:$0x3]
    %v44 = vld [vmem:[%s2] sm:$0x1]
    %v46 = vlaneseq
    %v47 = vshrl.u32 %v46, 7
    %v48 = vsub.s32 0, %v47
    %v49 = vrot.slane %v44, %v48
    %vm51 = vcmask 80896
    %v53 = vsel %vm51, %v41, 0
    %vm55 = vcmask 1041408
    %v57 = vsel %vm55, %v43, 0
    %59 = vmatprep.subr.mxu0 0.0
    %60 = vmatpush1.msra.mxu0 %v42
    %61 = vmatprep.subr.mxu0 0.0
    %62 = vmatpush1.msra.mxu0 %v57
    %63 = vmatprep.subr.mxu0 0.0
    %64 = vmatpush1.msra.mxu0 0.0
    %65 = vmatprep.subr.mxu0 0.0
    %66 = vmatpush1.msra.mxu0 0.0
    %67 = vmatprep.subr.mxu0 0.0
    %68 = vmatpush1.msra.mxu0 0.0
    %69 = vmatprep.subr.mxu0 0.0
    %70 = vmatpush1.msra.mxu0 0.0
    %71 = vmatprep.subr.mxu0 0.0
    %72 = vmatpush1.msra.mxu0 0.0
    %73 = vmatprep.subr.mxu0 0.0
    %74 = vmatpush1.msra.mxu0 0.0
    %75 = vmatprep.subr.mxu0 0.0
    %76 = vmatpush1.msra.mxu0 0.0
    %77 = vmatprep.subr.mxu0 0.0
    %78 = vmatpush1.msra.mxu0 0.0
    %79 = vmatprep.subr.mxu0 0.0
    %80 = vmatpush1.msra.mxu0 0.0
    %81 = vmatprep.subr.mxu0 0.0
    %82 = vmatpush1.msra.mxu0 0.0
    %83 = vmatprep.subr.mxu0 0.0
    %84 = vmatpush1.msra.mxu0 0.0
    %85 = vmatprep.subr.mxu0 0.0
    %86 = vmatpush1.msra.mxu0 0.0
    %87 = vmatprep.subr.mxu0 0.0
    %88 = vmatpush1.msra.mxu0 0.0
    %89 = vmatprep.subr.mxu0 0.0
    %90 = vmatpush1.msra.mxu0 0.0
    %91 = vmatprep.subr.mxu0 0.0
    %92 = vmatpush1.msra.mxu0 0.0
    %93 = vmatprep.subr.mxu0 0.0
    %94 = vmatpush1.msra.mxu0 0.0
    %95 = vmatprep.subr.mxu0 0.0
    %96 = vmatpush1.msra.mxu0 0.0
    %97 = vmatprep.subr.mxu0 0.0
    %98 = vmatpush1.msra.mxu0 0.0
    %99 = vmatprep.subr.mxu0 0.0
    %100 = vmatpush1.msra.mxu0 0.0
    %101 = vmatprep.subr.mxu0 0.0
    %102 = vmatpush1.msra.mxu0 0.0
    %103 = vmatprep.subr.mxu0 0.0
    %104 = vmatpush1.msra.mxu0 0.0
    %105 = vmatprep.subr.mxu0 0.0
    %106 = vmatpush1.msra.mxu0 0.0
    %107 = vmatprep.subr.mxu0 0.0
    %108 = vmatpush1.msra.mxu0 0.0
    %109 = vmatprep.subr.mxu0 0.0
    %110 = vmatpush1.msra.mxu0 0.0
    %111 = vmatprep.subr.mxu0 0.0
    %112 = vmatpush1.msra.mxu0 0.0
    %113 = vmatprep.subr.mxu0 0.0
    %114 = vmatpush1.msra.mxu0 0.0
    %115 = vmatprep.subr.mxu0 0.0
    %116 = vmatpush1.msra.mxu0 0.0
    %117 = vmatprep.subr.mxu0 0.0
    %118 = vmatpush1.msra.mxu0 0.0
    %119 = vmatprep.subr.mxu0 0.0
    %120 = vmatpush1.msra.mxu0 0.0
    %121 = vmatprep.subr.mxu0 0.0
    %122 = vmatpush1.msra.mxu0 0.0
    %123 = vmatprep.mubr.f32.mxu0 0.0
    %124 = vmatmul.mubr.f32.gmra.mrb[0].mxu0 %v53
    %v125 = vpop.f32.mrb[0].mxu0
    %v126 = vadd.f32 %v49, %v125
    %v127 = vpop.f32.mrb[0].mxu0
    %128 = vdwg.mxu0
    %vm129 = vcmask 162816
    %130 = vst.msk [vmem:[#allocation7] sm:$0xff] %vm129, %v126
    // Predicated region
    $region22: #{data_parallel_model.1} parent=1 // pred_check
      _
    $region23: #{data_parallel_model.1} parent=1 // pred_check_branch
      %132 = sbr.rel (0) target = $region25
    $region24: #{data_parallel_model.1} parent=1 // pred_region
      %s134 = ssub.s32 128, 128
      %135 = vsyncadd [#allocation4], %s134
      %s137 = sshll.u32 [#allocation7], 4
      %s138 = int_to_ptr.vmem [resolvable:$true] %s137
      %140 = dma.vmem_to_hbm [thread:$0]  %s138, 128, %s3, [#allocation4]
    $region25: #{data_parallel_model.1} parent=1 // pred_fallthru
      _
    // Predicated region
    $region26: #{data_parallel_model.1} parent=1 // pred_check
      _
    $region27: #{data_parallel_model.1} parent=1 // pred_check_branch
      %142 = sbr.rel (0) target = $region29
    $region28: #{data_parallel_model.1} parent=1 // pred_region
      %143 = dma.done [#allocation4], 128
    $region29: #{data_parallel_model.1} parent=1 // pred_fallthru
      _
    %144 = vsyncpa [#allocation3], 1
    %145 = vsyncpa [#allocation6], 1
    %146 = vsyncpa [#allocation4], 1

</llo_original>
